<compile_context>
chip_gen: v6e
topology: v6e:2x2x1
jax: 0.10.0
libtpu: 0.0.40
codegen_flags: <defaults>
</compile_context>

<pallas_src>
import jax
import jax.numpy as jnp
from jax import lax
from jax.experimental import pallas as pl
from jax.experimental.pallas import tpu as pltpu


def nsp_head_kernel(x_ref, w_ref, b_ref, o_ref):
    # x: [TB, H] (VMEM), w: [H, 2] (VMEM), b: [2] f32 (SMEM) -> o: [TB, 2]
    acc = jnp.dot(x_ref[...], w_ref[...], preferred_element_type=jnp.float32)
    # Bias from SMEM scalars via an iota-select (avoids a padded VMEM tile).
    col = lax.broadcasted_iota(jnp.int32, acc.shape, 1)
    bias = jnp.where(col == 0, b_ref[0], b_ref[1])
    o_ref[...] = (acc + bias).astype(o_ref.dtype)


def _tpu_generation():
    """Best-effort TPU generation sniff; falls back to the conservative path."""
    try:
        kind = jax.devices()[0].device_kind.lower()
    except Exception:
        return "unknown"
    if "v7" in kind:
        return "v7x"
    if "v6" in kind:
        return "v6e"
    if "v5" in kind:
        return "v5e"
    return "unknown"


def _round_up16(n):
    return ((n + 15) // 16) * 16


def _pick_batch_tile(batch, h, itemsize, budget_bytes, target_steps):
    """Pick the batch row-tile.

    Constraints (from perf review):
      * keep at least `target_steps` grid steps when batch allows it, so the
        x DMA / compute / writeback pipeline overlaps and (on v7x) both
        TensorCores get work,
      * one x buffer stays within `budget_bytes` (double-buffered by Pallas),
      * tile rows are a multiple of 16 (bf16 sublane packing).
    """
    if batch <= 16:
        # Single full-array block (block_shape == full array dims is legal).
        return batch
    cap_rows = max(16, (budget_bytes // max(1, h * itemsize)) // 16 * 16)
    want = _round_up16(pl.cdiv(batch, target_steps))
    return max(16, min(cap_rows, want))


def bert_only_nsp_head(pooled_output, weight_t, bias):
    """pooled_output: [B, H] (f32 or bf16), weight_t: [H, 2], bias: [2]."""
    B, H = pooled_output.shape
    x = pooled_output
    w = weight_t.astype(pooled_output.dtype)
    b = bias.astype(jnp.float32)  # two 32-bit scalars in SMEM

    gen = _tpu_generation()
    if gen in ("v6e", "v7x"):
        # 2 x 12 MiB x-buffers + tiny weight/out buffers fit the 32 MiB
        # default scoped VMEM (v7x physical 64 MiB); halves per-step overhead
        # vs a 4 MiB tile at these HBM bandwidths.
        budget = 12 * 1024 * 1024
        vmem_limit = 28 * 1024 * 1024
    else:
        # v5e (or unknown): 16 MiB default scoped VMEM -> keep 4 MiB buffers.
        budget = 4 * 1024 * 1024
        vmem_limit = None
    # v7x: aim for >= 8 steps (even split across 2 TCs); others: >= 4 steps.
    target_steps = 8 if gen == "v7x" else 4

    TB = _pick_batch_tile(B, H, x.dtype.itemsize, budget, target_steps)
    grid = (pl.cdiv(B, TB),)

    itemsize = x.dtype.itemsize
    cost = pl.CostEstimate(
        flops=4 * B * H,
        transcendentals=0,
        bytes_accessed=B * H * itemsize
        + H * 2 * itemsize
        + B * 2 * pooled_output.dtype.itemsize,
    )

    cp_kwargs = dict(
        # Batch tiles are independent -> shard grid steps across v7x's 2 TCs.
        dimension_semantics=("parallel",),
    )
    if vmem_limit is not None:
        cp_kwargs["vmem_limit_bytes"] = vmem_limit

    return pl.pallas_call(
        nsp_head_kernel,
        out_shape=jax.ShapeDtypeStruct((B, 2), pooled_output.dtype),
        grid=grid,
        in_specs=[
            # Streamed batch tiles of the activations; full (unpadded) H.
            pl.BlockSpec((TB, H), lambda i: (i, 0)),
            # Weight resident across all grid steps.
            pl.BlockSpec((H, 2), lambda i: (0, 0)),
            # Bias as SMEM scalars (no padded VMEM tile, no per-step DMA).
            pl.BlockSpec(memory_space=pltpu.MemorySpace.SMEM),
        ],
        out_specs=pl.BlockSpec((TB, 2), lambda i: (i, 0)),
        compiler_params=pltpu.CompilerParams(**cp_kwargs),
        cost_estimate=cost,
    )(x, w, b)


if __name__ == "__main__":
    key = jax.random.PRNGKey(0)
    k_x, k_w, k_b, k_x2 = jax.random.split(key, 4)

    # --- Small demo shapes consistent with the module ---------------------
    B, H = 8, 32  # (batch, hidden_size)
    bound = 1.0 / (H ** 0.5)
    weight = jax.random.uniform(k_w, (2, H), jnp.float32, -bound, bound)  # PyTorch layout [out, in]
    bias = jax.random.uniform(k_b, (2,), jnp.float32, -bound, bound)
    weight_t = weight.T  # [H, 2] so the kernel does x @ W^T
    pooled_output = jax.random.normal(k_x, (B, H), jnp.float32)

    # f32 path: exact semantics of the PyTorch module.
    out = bert_only_nsp_head(pooled_output, weight_t, bias)
    out = jax.block_until_ready(out)
    ref = pooled_output @ weight_t + bias[None, :]
    assert out.shape == (B, 2)
    assert jnp.allclose(out, ref, atol=1e-5, rtol=1e-5)

    # bf16 activation/weight path (halves the HBM-bound read), f32 accumulation.
    x_bf16 = pooled_output.astype(jnp.bfloat16)
    w_bf16 = weight_t.astype(jnp.bfloat16)
    out_bf16 = bert_only_nsp_head(x_bf16, w_bf16, bias)
    out_bf16 = jax.block_until_ready(out_bf16)
    ref_bf16 = x_bf16.astype(jnp.float32) @ w_bf16.astype(jnp.float32) + bias[None, :]
    assert out_bf16.shape == (B, 2)
    assert jnp.allclose(out_bf16.astype(jnp.float32), ref_bf16, atol=2e-2, rtol=2e-2)

    # Slightly larger case to exercise the multi-step (tiled) grid path.
    B2, H2 = 64, 128
    x2 = jax.random.normal(k_x2, (B2, H2), jnp.float32)
    w2 = jax.random.uniform(k_w, (H2, 2), jnp.float32, -1.0 / (H2 ** 0.5), 1.0 / (H2 ** 0.5))
    out2 = jax.block_until_ready(bert_only_nsp_head(x2, w2, bias))
    ref2 = x2 @ w2 + bias[None, :]
    assert out2.shape == (B2, 2)
    assert jnp.allclose(out2, ref2, atol=1e-5, rtol=1e-5)

    print("KERNEL_OK")
</pallas_src>

<mosaic_0001>
module attributes {stable_mosaic.version = 11 : i64} {
  func.func @nsp_head_kernel(%arg0: i32, %arg1: memref<8x32xf32, #tpu.memory_space<vmem>>, %arg2: memref<32x2xf32, #tpu.memory_space<vmem>>, %arg3: memref<2xf32, #tpu.memory_space<smem>>, %arg4: memref<8x2xf32, #tpu.memory_space<vmem>>) attributes {dimension_semantics = [#tpu.dimension_semantics<parallel>], iteration_bounds = array<i64: 1>, scalar_prefetch = 0 : i64, scratch_operands = 0 : i64, tpu.core_type = #tpu.core_type<tc>, window_params = [{transform_indices = @transform_0, window_bounds = array<i64: 8, 32>}, {pipeline_mode = #tpu.pipeline_mode<synchronous>, transform_indices = @transform_1, window_bounds = array<i64: 32, 2>}, {transform_indices = @transform_2, window_bounds = array<i64: 2>}, {transform_indices = @transform_3, window_bounds = array<i64: 8, 2>}]} {
    %c0 = arith.constant 0 : index
    %c0_0 = arith.constant 0 : index
    %0 = vector.load %arg1[%c0, %c0_0] : memref<8x32xf32, #tpu.memory_space<vmem>>, vector<8x32xf32>
    %c0_1 = arith.constant 0 : index
    %c0_2 = arith.constant 0 : index
    %1 = vector.load %arg2[%c0_1, %c0_2] : memref<32x2xf32, #tpu.memory_space<vmem>>, vector<32x2xf32>
    %cst = arith.constant dense<0.000000e+00> : vector<8x2xf32>
    %2 = tpu.matmul %0, %1, %cst {dimension_numbers = #tpu.dot_dimension_numbers<[1], [0], [0], [1], [0, 0, 1, 1], [], []>} : vector<8x32xf32>, vector<32x2xf32>, vector<8x2xf32> -> vector<8x2xf32>
    %3 = tpu.iota {dimensions = array<i32: 1>} : vector<8x2xi32>
    %c0_i32 = arith.constant 0 : i32
    %4 = vector.broadcast %c0_i32 : i32 to vector<8x2xi32>
    %5 = arith.cmpi eq, %3, %4 : vector<8x2xi32>
    %c0_3 = arith.constant 0 : index
    %6 = memref.load %arg3[%c0_3] : memref<2xf32, #tpu.memory_space<smem>>
    %c1 = arith.constant 1 : index
    %7 = memref.load %arg3[%c1] : memref<2xf32, #tpu.memory_space<smem>>
    %8 = vector.broadcast %6 : f32 to vector<8x2xf32>
    %9 = vector.broadcast %7 : f32 to vector<8x2xf32>
    %10 = arith.select %5, %8, %9 : vector<8x2xi1>, vector<8x2xf32>
    %11 = arith.addf %2, %10 : vector<8x2xf32>
    %c0_4 = arith.constant 0 : index
    %c0_5 = arith.constant 0 : index
    %12 = vector.load %arg4[%c0_4, %c0_5] : memref<8x2xf32, #tpu.memory_space<vmem>>, vector<8x2xf32>
    tpu.vector_store %arg4[%c0_4, %c0_5], %11 {strides = array<i32>} : memref<8x2xf32, #tpu.memory_space<vmem>>, vector<8x2xf32>,
    return
  }
  func.func @transform_0(%arg0: i32) -> (i32, i32) {
    %c0_i32 = arith.constant 0 : i32
    %c0_i32_0 = arith.constant 0 : i32
    return %arg0, %c0_i32 : i32, i32
  }
  func.func @transform_1(%arg0: i32) -> (i32, i32) {
    %c0_i32 = arith.constant 0 : i32
    %c0_i32_0 = arith.constant 0 : i32
    %c0_i32_1 = arith.constant 0 : i32
    return %c0_i32, %c0_i32_0 : i32, i32
  }
  func.func @transform_2(%arg0: i32) -> i32 {
    %c0_i32 = arith.constant 0 : i32
    %c0_i32_0 = arith.constant 0 : i32
    return %c0_i32 : i32
  }
  func.func @transform_3(%arg0: i32) -> (i32, i32) {
    %c0_i32 = arith.constant 0 : i32
    %c0_i32_0 = arith.constant 0 : i32
    return %arg0, %c0_i32 : i32, i32
  }
}

</mosaic_0001>

<llo_original>
// kernel: tpu_custom_call.1
$region0: #{tpu_custom_call.1}
  #allocation0 [shape = 'u32[]', space=smem, size = 0x4, offset = 0x4, fixed_abs, tag = 'smem constant byte address 0x4 - core index']
  #allocation1 [shape = 'u32[144,128]{1,0:T(1,128)}', space=vmem, size = 0x12000, scoped, tag = 'internal scratch']
  %s0 = inlined_call_operand.vmem [shape: f32[8,32], index: 0, kind: input, shape index: {}]
  %s1 = inlined_call_operand.vmem [shape: f32[32,2], index: 1, kind: input, shape index: {}]
  %s2 = inlined_call_operand.vmem [shape: f32[2], index: 2, kind: input, shape index: {}]
  %s3 = inlined_call_operand.vmem [shape: f32[8,2], index: 3, kind: output, shape index: {}]
  %s4 = sld [smem:[#allocation0]]
  $region26: #{tpu_custom_call.1} parent=0
    _
  %s6 = ssub.s32 1, %s4
  %s7 = scalar_select 0, %s6, %s4
  $region1: #{tpu_custom_call.1} parent=0
    #allocation2 [shape = 'u8[512]{0}', space=smem, size = 0x200, scoped, tag = 'input window, operand 2, single buffered']
    #allocation3 [shape = 's32[1]{0}', space=sflag, size = 0x4, scoped, tag = 'scoped memory for tpu_custom_call.1']
    %8 = vsyncpa [#allocation3], 0
    // Predicated region
    $region2: #{tpu_custom_call.1} parent=1 // pred_check
      _
    $region3: #{tpu_custom_call.1} parent=1 // pred_check_branch
      %10 = sbr.rel (0) target = $region5
    $region4: #{tpu_custom_call.1} parent=1 // pred_region
      _
    $region5: #{tpu_custom_call.1} parent=1 // pred_fallthru
      _
    // Predicated region
    $region6: #{tpu_custom_call.1} parent=1 // pred_check
      _
    $region7: #{tpu_custom_call.1} parent=1 // pred_check_branch
      %12 = sbr.rel (0) target = $region9
    $region8: #{tpu_custom_call.1} parent=1 // pred_region
      _
    $region9: #{tpu_custom_call.1} parent=1 // pred_fallthru
      _
    // Predicated region
    $region10: #{tpu_custom_call.1} parent=1 // pred_check
      _
    $region11: #{tpu_custom_call.1} parent=1 // pred_check_branch
      %14 = sbr.rel (0) target = $region13
    $region12: #{tpu_custom_call.1} parent=1 // pred_region
      %s16 = ssub.s32 16, 16
      %17 = vsyncadd [#allocation3], %s16
      %s19 = sshll.u32 %s2, 4
      %s20 = int_to_ptr.vmem [resolvable:$true] %s19
      %22 = dma.vmem_to_smem %s20, 16, [#allocation2], [#allocation3]
    $region13: #{tpu_custom_call.1} parent=1 // pred_fallthru
      _
    // Predicated region
    $region14: #{tpu_custom_call.1} parent=1 // pred_check
      _
    $region15: #{tpu_custom_call.1} parent=1 // pred_check_branch
      %24 = sbr.rel (0) target = $region17
    $region16: #{tpu_custom_call.1} parent=1 // pred_region
      %25 = dma.done [#allocation3], 16
    $region17: #{tpu_custom_call.1} parent=1 // pred_fallthru
      _
    %26 = sfence
    %v27 = vld [vmem:[%s0] sm:$0xff]
    %v28 = vld [vmem:[%s1] sm:$0xff]
    %v29 = vld [vmem:[%s1 + $0x8] sm:$0xff]
    %v30 = vld [vmem:[%s1 + $0x10] sm:$0xff]
    %v31 = vld [vmem:[%s1 + $0x18] sm:$0xff]
    %v32 = vlaneseq
    %v33 = vand.u32 %v32, 127
    %vm34 = vcmp.eq.s32.totalorder %v33, 0
    %s35 = sld [smem:[#allocation2]]
    %s36 = sld [smem:[#allocation2 + $0x1]]
    %v37 = vstv %s35
    %v38 = vstv %s36
    %v39 = vsel %vm34, %v37, %v38
    %vm40 = vcmask 261120
    %v42 = vsel %vm40, %v27, 0
    %44 = vmatprep.subr.mxu0 0.0
    %45 = vmatpush1.msra.mxu0 0.0
    %46 = vmatprep.subr.mxu0 0.0
    %47 = vmatpush1.msra.mxu0 0.0
    %48 = vmatprep.subr.mxu0 0.0
    %49 = vmatpush1.msra.mxu0 0.0
    %50 = vmatprep.subr.mxu0 0.0
    %51 = vmatpush1.msra.mxu0 0.0
    %52 = vmatprep.subr.mxu0 0.0
    %53 = vmatpush1.msra.mxu0 0.0
    %54 = vmatprep.subr.mxu0 0.0
    %55 = vmatpush1.msra.mxu0 0.0
    %56 = vmatprep.subr.mxu0 0.0
    %57 = vmatpush1.msra.mxu0 0.0
    %58 = vmatprep.subr.mxu0 0.0
    %59 = vmatpush1.msra.mxu0 0.0
    %60 = vmatprep.subr.mxu0 0.0
    %61 = vmatpush1.msra.mxu0 0.0
    %62 = vmatprep.subr.mxu0 0.0
    %63 = vmatpush1.msra.mxu0 0.0
    %64 = vmatprep.subr.mxu0 0.0
    %65 = vmatpush1.msra.mxu0 0.0
    %66 = vmatprep.subr.mxu0 0.0
    %67 = vmatpush1.msra.mxu0 0.0
    %68 = vmatprep.subr.mxu0 0.0
    %69 = vmatpush1.msra.mxu0 %v31
    %70 = vmatprep.subr.mxu0 0.0
    %71 = vmatpush1.msra.mxu0 %v30
    %72 = vmatprep.subr.mxu0 0.0
    %73 = vmatpush1.msra.mxu0 %v29
    %74 = vmatprep.subr.mxu0 0.0
    %75 = vmatpush1.msra.mxu0 %v28
    %76 = vmatprep.subr.mxu0 0.0
    %77 = vmatpush2.msra.mxu0 0.0
    %78 = vmatprep.subr.mxu0 0.0
    %79 = vmatpush2.msra.mxu0 0.0
    %80 = vmatprep.subr.mxu0 0.0
    %81 = vmatpush2.msra.mxu0 0.0
    %82 = vmatprep.subr.mxu0 0.0
    %83 = vmatpush2.msra.mxu0 0.0
    %84 = vmatprep.subr.mxu0 0.0
    %85 = vmatpush2.msra.mxu0 0.0
    %86 = vmatprep.subr.mxu0 0.0
    %87 = vmatpush2.msra.mxu0 0.0
    %88 = vmatprep.subr.mxu0 0.0
    %89 = vmatpush2.msra.mxu0 0.0
    %90 = vmatprep.subr.mxu0 0.0
    %91 = vmatpush2.msra.mxu0 0.0
    %92 = vmatprep.subr.mxu0 0.0
    %93 = vmatpush2.msra.mxu0 0.0
    %94 = vmatprep.subr.mxu0 0.0
    %95 = vmatpush2.msra.mxu0 0.0
    %96 = vmatprep.subr.mxu0 0.0
    %97 = vmatpush2.msra.mxu0 0.0
    %98 = vmatprep.subr.mxu0 0.0
    %99 = vmatpush2.msra.mxu0 0.0
    %100 = vmatprep.subr.mxu0 0.0
    %101 = vmatpush2.msra.mxu0 0.0
    %102 = vmatprep.subr.mxu0 0.0
    %103 = vmatpush2.msra.mxu0 0.0
    %104 = vmatprep.subr.mxu0 0.0
    %105 = vmatpush2.msra.mxu0 0.0
    %106 = vmatprep.subr.mxu0 0.0
    %107 = vmatpush2.msra.mxu0 0.0
    %108 = vmatprep.mubr.f32.mxu0 0.0
    %109 = vmatmul.mubr.f32.gmra.mxu0 %v42
    %v110 = vpop.f32.mrf.mxu0
    %v111 = vadd.f32 %v39, %v110
    %v112 = vpop.f32.mrf.mxu0
    %113 = vdwg.mxu0
    %vm114 = vcmask 15360
    %115 = vst.msk [vmem:[%s3] sm:$0xff] %vm114, %v111
    // Predicated region
    $region18: #{tpu_custom_call.1} parent=1 // pred_check
      _
    $region19: #{tpu_custom_call.1} parent=1 // pred_check_branch
      %117 = sbr.rel (0) target = $region21
    $region20: #{tpu_custom_call.1} parent=1 // pred_region
      _
    $region21: #{tpu_custom_call.1} parent=1 // pred_fallthru
      _
    // Predicated region
    $region22: #{tpu_custom_call.1} parent=1 // pred_check
      _
    $region23: #{tpu_custom_call.1} parent=1 // pred_check_branch
      %119 = sbr.rel (0) target = $region25
    $region24: #{tpu_custom_call.1} parent=1 // pred_region
      _
    $region25: #{tpu_custom_call.1} parent=1 // pred_fallthru
      _
    %120 = vsyncpa [#allocation3], 1

</llo_original>
